<compile_context>
chip_gen: v5e
topology: v5e:2x2
jax: 0.10.0
libtpu: 0.0.40
codegen_flags: <defaults>
</compile_context>

<pallas_src>
import jax
import jax.numpy as jnp
from jax.experimental import pallas as pl
from jax.experimental.pallas import tpu as pltpu


def _bridge_dma_kernel(enc_hbm, out_hbm, sem):
    # Identity bridge: one whole-array HBM->HBM DMA.  No VMEM staging, no
    # vreg traffic, no vector load/store slots — pure DMA-engine bandwidth.
    cp = pltpu.make_async_copy(enc_hbm, out_hbm, sem)
    cp.start()
    cp.wait()


def _bridge_kernel_call(encoder_state: jax.Array) -> jax.Array:
    nbytes = encoder_state.size * encoder_state.dtype.itemsize
    return pl.pallas_call(
        _bridge_dma_kernel,
        out_shape=jax.ShapeDtypeStruct(encoder_state.shape, encoder_state.dtype),
        # Leave both operands in HBM; the kernel drives the copy itself.
        in_specs=[pl.BlockSpec(memory_space=pl.ANY)],
        out_specs=pl.BlockSpec(memory_space=pl.ANY),
        scratch_shapes=[pltpu.SemaphoreType.DMA],
        cost_estimate=pl.CostEstimate(
            flops=0, transcendentals=0, bytes_accessed=2 * nbytes
        ),
    )(encoder_state)


def bridge_base_forward(
    encoder_state: jax.Array, *, force_kernel: bool = False
) -> jax.Array:
    """Identity bridge of encoder_state [B, S, H] -> [B, S, H].

    Default path is a true pass-through (zero HBM traffic, no kernel launch).
    Set force_kernel=True to route the pass-through through a Pallas kernel
    boundary implemented as a single HBM->HBM DMA.
    """
    if not force_kernel:
        return encoder_state
    return _bridge_kernel_call(encoder_state)


if __name__ == "__main__":
    key = jax.random.PRNGKey(0)
    B, S, H = 2, 8, 32  # small shapes consistent with an encoder state
    encoder_state = jax.random.normal(key, (B, S, H), dtype=jnp.float32)

    # Run the Pallas kernel path explicitly (the default path is a no-op
    # pass-through, which is the fastest possible "bridge").
    out = bridge_base_forward(encoder_state, force_kernel=True)
    out = jax.block_until_ready(out)

    # BridgeBase pass-through semantics must hold exactly.
    assert out.shape == encoder_state.shape
    assert out.dtype == encoder_state.dtype
    assert bool(jnp.all(out == encoder_state))

    print("KERNEL_OK")
</pallas_src>

<mosaic_0001>
module attributes {stable_mosaic.version = 11 : i64} {
  func.func @_bridge_dma_kernel(%arg0: memref<2x8x32xf32, #tpu.memory_space<any>>, %arg1: memref<2x8x32xf32, #tpu.memory_space<any>>, %arg2: memref<!tpu.dma_semaphore, #tpu.memory_space<semaphore_mem>>) attributes {dimension_semantics = [], scalar_prefetch = 0 : i64, scratch_operands = 1 : i64, tpu.core_type = #tpu.core_type<tc>} {
    tpu.enqueue_dma source(%arg0 : memref<2x8x32xf32, #tpu.memory_space<any>>) target(%arg1 : memref<2x8x32xf32, #tpu.memory_space<any>>) target_semaphore(%arg2 : memref<!tpu.dma_semaphore, #tpu.memory_space<semaphore_mem>>)
    tpu.wait_dma2 semaphore(%arg2 : memref<!tpu.dma_semaphore, #tpu.memory_space<semaphore_mem>>) src(%arg0 : memref<2x8x32xf32, #tpu.memory_space<any>>) dst(%arg1 : memref<2x8x32xf32, #tpu.memory_space<any>>)
    return
  }
}

</mosaic_0001>

<llo_original>
// kernel: tpu_custom_call.1
$region0: #{tpu_custom_call.1}
  #allocation0 [shape = 'u32[]', space=smem, size = 0x4, offset = 0x4, fixed_abs, tag = 'smem constant byte address 0x4 - core index']
  #allocation1 [shape = 'u32[72,128]{1,0:T(1,128)}', space=vmem, size = 0x9000, scoped, tag = 'internal scratch']
  #allocation2 [shape = 's32[1]{0}', space=sflag, size = 0x4, scoped, tag = 'scratch operand']
  #allocation3 [shape = 's32[]', space=sflag, size = 0x4, offset = 0, fixed_abs, tag = 'sflag constant byte address 0x0 - dummy sync flag']
  #allocation4 [shape = 'u32[0]{0}', space=smem, size = 0, offset = 0, fixed_abs, tag = 'smem constant byte address 0x0 - null']
  %s0 = inlined_call_operand.hbm [shape: f32[2,8,32], index: 0, kind: input, shape index: {}]
  %s1 = inlined_call_operand.hbm [shape: f32[2,8,32], index: 1, kind: output, shape index: {}]
  %s2 = sld [smem:[#allocation0]]
  $region2: #{tpu_custom_call.1} parent=0
    _
  %s4 = ssub.s32 1, %s2
  %s5 = scalar_select 0, %s4, %s2
  %s7 = sshll.u32 1, 14
  %s8 = sxor.u32 4294967295, %s7
  %s10 = sshll.u32 %s0, 4
  %s11 = int_to_ptr.hbm [resolvable:$true] %s10
  %s12 = sshll.u32 %s1, 4
  %s13 = int_to_ptr.hbm [resolvable:$true] %s12
  %16 = dma.general %s11, 256, %s13, [#allocation2], [#allocation3], [#allocation4], 0, 0
  %s17 = smul.u32 2, 8
  %s18 = smul.u32 %s17, 1
  %s19 = sshll.u32 %s18, 4
  %20 = dma.done [#allocation2], %s19
  %21 = vsyncmov [#allocation2]
  %s22 = vpop.sfrf %21
  %p23 = scmp.eq.s32.totalorder %s22, 0
  %p24 = pneg %p23
  %26 = shalt.err (%p24)

</llo_original>
